<compile_context>
chip_gen: v7x
topology: tpu7x:2x2x1
jax: 0.10.0
libtpu: 0.0.40
codegen_flags: <defaults>
</compile_context>

<pallas_src>
import functools

import jax
import jax.numpy as jnp
from jax import lax
from jax.experimental import pallas as pl
from jax.experimental.pallas import tpu as pltpu

PARAM_LAMBDA = 0.001   # HHLoss.param_lambda
PARAM_BETA = 0.002     # HHLoss.param_beta


def _round_up(v: int, m: int) -> int:
    return (v + m - 1) // m * m


def _cdiv(a: int, b: int) -> int:
    return (a + b - 1) // b


def _hh_gram_kernel(x_ref, t_ref, g_ref, h_ref, k_ref, u_ref, *,
                    n_true: int, tiles_per_core: int, tm: int, needs_mask: bool):
    """Grid = (core, row-tile). Accumulates per-core G/H/K/u into the outputs."""
    ci = pl.program_id(0)   # "parallel" core axis
    ii = pl.program_id(1)   # "arbitrary" reduction axis (row tiles per core)

    @pl.when(ii == 0)
    def _init():
        g_ref[...] = jnp.zeros_like(g_ref)
        h_ref[...] = jnp.zeros_like(h_ref)
        k_ref[...] = jnp.zeros_like(k_ref)
        u_ref[...] = jnp.zeros_like(u_ref)

    x = x_ref[...]                       # (tm, D)  matmul_dtype row tile of X
    t = t_ref[...]                       # (tm, C)  matmul_dtype row tile of T

    if needs_mask:
        # Zero rows beyond the true N (partial edge tile and/or tiles whose
        # index_map was clamped because core_split * tiles_per_core over-covers
        # the row range).  Uses the UNCLAMPED global row index on purpose.
        row0 = (ci * tiles_per_core + ii) * tm
        rows = lax.broadcasted_iota(jnp.int32, (tm, 1), 0) + row0
        valid = rows < n_true
        x = jnp.where(valid, x, 0)
        t = jnp.where(valid, t, 0)

    # Contract over the sample (row) axis of both operands; f32 accumulation
    # via preferred_element_type into the f32 output accumulators.
    dn = (((0,), (0,)), ((), ()))
    g_ref[...] += lax.dot_general(x, x, dn, preferred_element_type=jnp.float32)
    h_ref[...] += lax.dot_general(x, t, dn, preferred_element_type=jnp.float32)
    k_ref[...] += lax.dot_general(t, t, dn, preferred_element_type=jnp.float32)
    # Column sum of X, accumulated in f32 (v5e has no bf16 VALU anyway).
    u_ref[...] += jnp.sum(x.astype(jnp.float32), axis=0, keepdims=True)


def _hh_finalize(g_p, h_p, k_p, u_p, n: int, d: int):
    """Tiny DxD finalize: combine per-core partials into the scalar loss."""
    g = jnp.sum(g_p, axis=0)                      # G = X^T X      (D, D)
    h = jnp.sum(h_p, axis=0)                      # H = X^T T      (D, C)
    k = jnp.sum(k_p, axis=0)                      # K = T^T T      (C, C)
    u = jnp.sum(u_p, axis=0)                      # u = colsum(X)  (1, D)
    nf = jnp.float32(n)
    hp = lax.Precision.HIGHEST

    g_fro2 = jnp.sum(g * g)                       # tr(G^2) = ||X X^T||_F^2
    h_fro2 = jnp.sum(h * h)                       # tr(X X^T T T^T)
    k_fro2 = jnp.sum(k * k)                       # ||T T^T||_F^2

    # term 1: ||X X^T - T T^T||_F
    term1 = jnp.sqrt(jnp.maximum(g_fro2 - 2.0 * h_fro2 + k_fro2, 0.0))

    # term 2: ||sum(X X^T, 0)||_2 = sqrt(u^T G u)
    v = jnp.dot(u, g, precision=hp)               # (1, D)
    term2 = jnp.sqrt(jnp.maximum(jnp.sum(v * u), 0.0))

    # term 3: ||(X X^T)^2/N - I_N||_F = sqrt(||G^2/N - I_D||_F^2 + (N - D))
    a = jnp.dot(g, g, precision=hp) / nf          # G^2 / N   (D, D)
    t3sq = jnp.sum((a - jnp.eye(d, dtype=jnp.float32)) ** 2) + (nf - jnp.float32(d))
    term3 = jnp.sqrt(jnp.maximum(t3sq, 0.0))

    return term1 + PARAM_LAMBDA * term2 + PARAM_BETA * term3


def hh_loss(x, t, *, block_rows: int = 2048, matmul_dtype=jnp.bfloat16,
            core_split: int = 2):
    """x: (N, D), t: (N, C) -> scalar float32 HHLoss (forward only)."""
    assert x.ndim == 2 and t.ndim == 2 and x.shape[0] == t.shape[0]
    n, d = x.shape
    _, c = t.shape

    # Accept caller dtype; cast once only if needed (bf16 halves streamed bytes).
    xs = x if x.dtype == matmul_dtype else x.astype(matmul_dtype)
    ts = t if t.dtype == matmul_dtype else t.astype(matmul_dtype)
    itemsize = jnp.dtype(matmul_dtype).itemsize

    # Row tile: as big as possible (amortizes per-grid-step overhead), multiple
    # of 8 (sublane), capped so double-buffered input tiles + f32 accumulators
    # stay comfortably inside v7x's 64 MiB physical VMEM.
    tm = min(_round_up(block_rows, 8), _round_up(n, 8))
    acc_bytes = 4 * (d * d + d * c + c * c + d)

    def vmem_needed(rows):
        return 2 * 2 * rows * (d + c) * itemsize + 2 * acc_bytes

    while tm > 256 and vmem_needed(tm) > (40 << 20):
        tm = _round_up(tm // 2, 8)

    n_tiles = _cdiv(n, tm)
    core_split = max(1, min(core_split, n_tiles))
    tiles_per_core = _cdiv(n_tiles, core_split)
    grid = (core_split, tiles_per_core)
    # Mask only if the grid over-covers the true row range.
    needs_mask = core_split * tiles_per_core * tm != n

    def row_map(ci, ii):
        # Clamp so over-coverage tiles (fully masked in-kernel) stay in bounds.
        return (jnp.minimum(ci * tiles_per_core + ii, n_tiles - 1), 0)

    kernel = functools.partial(_hh_gram_kernel, n_true=n,
                               tiles_per_core=tiles_per_core, tm=tm,
                               needs_mask=needs_mask)

    # Per-core partial accumulators are kernel OUTPUTS (leading core axis).
    def acc_spec(d1, d2):
        return pl.BlockSpec((None, d1, d2), lambda ci, ii: (ci, 0, 0))

    g_p, h_p, k_p, u_p = pl.pallas_call(
        kernel,
        out_shape=(
            jax.ShapeDtypeStruct((core_split, d, d), jnp.float32),   # G partials
            jax.ShapeDtypeStruct((core_split, d, c), jnp.float32),   # H partials
            jax.ShapeDtypeStruct((core_split, c, c), jnp.float32),   # K partials
            jax.ShapeDtypeStruct((core_split, 1, d), jnp.float32),   # u partials
        ),
        grid_spec=pltpu.PrefetchScalarGridSpec(
            num_scalar_prefetch=0,
            grid=grid,
            in_specs=[
                pl.BlockSpec((tm, d), row_map),   # unpadded: last dim == D
                pl.BlockSpec((tm, c), row_map),   # unpadded: last dim == C
            ],
            out_specs=(acc_spec(d, d), acc_spec(d, c),
                       acc_spec(c, c), acc_spec(1, d)),
        ),
        compiler_params=pltpu.CompilerParams(
            # Core axis parallel (2 TCs on v7x, no-op on v5e/v6e); row-tile axis
            # carries the resident output accumulators -> arbitrary.
            dimension_semantics=("parallel", "arbitrary"),
            vmem_limit_bytes=int(min(max(vmem_needed(tm) + (4 << 20), 32 << 20),
                                     64 << 20)),
        ),
    )(xs, ts)

    return _hh_finalize(g_p, h_p, k_p, u_p, n, d)


def hh_loss_ref(x, t):
    """Pure-JAX reference mirroring the PyTorch HHLoss.forward exactly."""
    x = x.astype(jnp.float32)
    t = t.astype(jnp.float32)
    hp = lax.Precision.HIGHEST
    input_s = jnp.dot(x, x.T, precision=hp)
    target_s = jnp.dot(t, t.T, precision=hp)
    uncorr = jnp.dot(input_s, input_s.T, precision=hp) / input_s.shape[0]
    eye = jnp.eye(input_s.shape[1], dtype=jnp.float32)
    return (jnp.linalg.norm(input_s - target_s)
            + PARAM_LAMBDA * jnp.linalg.norm(jnp.sum(input_s, 0))
            + PARAM_BETA * jnp.linalg.norm(uncorr - eye))


if __name__ == "__main__":
    key = jax.random.PRNGKey(0)
    k1, k2 = jax.random.split(key)
    N, D, C = 500, 32, 16   # N samples (not a tile multiple), D hash bits, C labels
    x = jax.random.normal(k1, (N, D), dtype=jnp.float32)
    # hashing-style +/-1 targets
    t = jnp.where(jax.random.uniform(k2, (N, C)) > 0.5, 1.0, -1.0).astype(jnp.float32)

    ref = hh_loss_ref(x, t)

    # f32 path, small tiles: exercises multi-tile accumulation, the 2-way core
    # split, the partial-edge-tile mask AND the clamped over-coverage tile.
    loss_f32 = hh_loss(x, t, block_rows=168, matmul_dtype=jnp.float32,
                       core_split=2)
    jax.block_until_ready(loss_f32)
    assert jnp.allclose(loss_f32, ref, rtol=2e-2, atol=1e-2), (loss_f32, ref)

    # Default fast path: caller-provided bf16, unpadded streaming, large tile.
    loss_bf16 = hh_loss(x.astype(jnp.bfloat16), t.astype(jnp.bfloat16))
    jax.block_until_ready(loss_bf16)
    assert jnp.allclose(loss_bf16, ref, rtol=3e-2, atol=1e-2), (loss_bf16, ref)

    print("KERNEL_OK")
</pallas_src>

<mosaic_0001>
module attributes {stable_mosaic.version = 11 : i64} {
  func.func @_hh_gram_kernel(%arg0: i32, %arg1: i32, %arg2: memref<168x32xf32, #tpu.memory_space<vmem>>, %arg3: memref<168x16xf32, #tpu.memory_space<vmem>>, %arg4: memref<1x32x32xf32, #tpu.memory_space<vmem>>, %arg5: memref<1x32x16xf32, #tpu.memory_space<vmem>>, %arg6: memref<1x16x16xf32, #tpu.memory_space<vmem>>, %arg7: memref<1x1x32xf32, #tpu.memory_space<vmem>>) attributes {dimension_semantics = [#tpu.dimension_semantics<parallel>, #tpu.dimension_semantics<arbitrary>], iteration_bounds = array<i64: 2, 2>, scalar_prefetch = 0 : i64, scratch_operands = 0 : i64, tpu.core_type = #tpu.core_type<tc>, window_params = [{transform_indices = @transform_0, window_bounds = array<i64: 168, 32>}, {transform_indices = @transform_1, window_bounds = array<i64: 168, 16>}, {transform_indices = @transform_2, window_bounds = array<i64: 1, 32, 32>}, {transform_indices = @transform_3, window_bounds = array<i64: 1, 32, 16>}, {transform_indices = @transform_4, window_bounds = array<i64: 1, 16, 16>}, {transform_indices = @transform_5, window_bounds = array<i64: 1, 1, 32>}]} {
    %c0_i32 = arith.constant 0 : i32
    %0 = arith.cmpi eq, %arg1, %c0_i32 : i32
    %1 = arith.extui %0 : i1 to i32
    %c0_i32_0 = arith.constant 0 : i32
    %2 = arith.cmpi ne, %1, %c0_i32_0 : i32
    scf.if %2 {
      %cst_33 = arith.constant 0.000000e+00 : f32
      %52 = vector.broadcast %cst_33 : f32 to vector<32x32xf32>
      %c0_34 = arith.constant 0 : index
      %c0_35 = arith.constant 0 : index
      %c0_36 = arith.constant 0 : index
      %53 = vector.load %arg4[%c0_34, %c0_35, %c0_36] : memref<1x32x32xf32, #tpu.memory_space<vmem>>, vector<1x32x32xf32>
      %54 = vector.shape_cast %53 : vector<1x32x32xf32> to vector<32x32xf32>
      %55 = vector.shape_cast %52 : vector<32x32xf32> to vector<1x32x32xf32>
      tpu.vector_store %arg4[%c0_34, %c0_35, %c0_36], %55 {strides = array<i32>} : memref<1x32x32xf32, #tpu.memory_space<vmem>>, vector<1x32x32xf32>,
      %cst_37 = arith.constant 0.000000e+00 : f32
      %56 = vector.broadcast %cst_37 : f32 to vector<32x16xf32>
      %c0_38 = arith.constant 0 : index
      %c0_39 = arith.constant 0 : index
      %c0_40 = arith.constant 0 : index
      %57 = vector.load %arg5[%c0_38, %c0_39, %c0_40] : memref<1x32x16xf32, #tpu.memory_space<vmem>>, vector<1x32x16xf32>
      %58 = vector.shape_cast %57 : vector<1x32x16xf32> to vector<32x16xf32>
      %59 = vector.shape_cast %56 : vector<32x16xf32> to vector<1x32x16xf32>
      tpu.vector_store %arg5[%c0_38, %c0_39, %c0_40], %59 {strides = array<i32>} : memref<1x32x16xf32, #tpu.memory_space<vmem>>, vector<1x32x16xf32>,
      %cst_41 = arith.constant 0.000000e+00 : f32
      %60 = vector.broadcast %cst_41 : f32 to vector<16x16xf32>
      %c0_42 = arith.constant 0 : index
      %c0_43 = arith.constant 0 : index
      %c0_44 = arith.constant 0 : index
      %61 = vector.load %arg6[%c0_42, %c0_43, %c0_44] : memref<1x16x16xf32, #tpu.memory_space<vmem>>, vector<1x16x16xf32>
      %62 = vector.shape_cast %61 : vector<1x16x16xf32> to vector<16x16xf32>
      %63 = vector.shape_cast %60 : vector<16x16xf32> to vector<1x16x16xf32>
      tpu.vector_store %arg6[%c0_42, %c0_43, %c0_44], %63 {strides = array<i32>} : memref<1x16x16xf32, #tpu.memory_space<vmem>>, vector<1x16x16xf32>,
      %cst_45 = arith.constant 0.000000e+00 : f32
      %64 = vector.broadcast %cst_45 : f32 to vector<1x32xf32>
      %c0_46 = arith.constant 0 : index
      %c0_47 = arith.constant 0 : index
      %c0_48 = arith.constant 0 : index
      %65 = vector.load %arg7[%c0_46, %c0_47, %c0_48] : memref<1x1x32xf32, #tpu.memory_space<vmem>>, vector<1x1x32xf32>
      %66 = vector.shape_cast %65 : vector<1x1x32xf32> to vector<1x32xf32>
      %67 = vector.shape_cast %64 : vector<1x32xf32> to vector<1x1x32xf32>
      tpu.vector_store %arg7[%c0_46, %c0_47, %c0_48], %67 {strides = array<i32>} : memref<1x1x32xf32, #tpu.memory_space<vmem>>, vector<1x1x32xf32>,
    } else {
    }
    %c0 = arith.constant 0 : index
    %c0_1 = arith.constant 0 : index
    %3 = vector.load %arg2[%c0, %c0_1] : memref<168x32xf32, #tpu.memory_space<vmem>>, vector<168x32xf32>
    %c0_2 = arith.constant 0 : index
    %c0_3 = arith.constant 0 : index
    %4 = vector.load %arg3[%c0_2, %c0_3] : memref<168x16xf32, #tpu.memory_space<vmem>>, vector<168x16xf32>
    %c2_i32 = arith.constant 2 : i32
    %5 = arith.muli %arg0, %c2_i32 : i32
    %6 = arith.addi %5, %arg1 : i32
    %c168_i32 = arith.constant 168 : i32
    %7 = arith.muli %6, %c168_i32 : i32
    %8 = tpu.iota {dimensions = array<i32: 0>} : vector<168x1xi32>
    %9 = vector.broadcast %7 : i32 to vector<168x1xi32>
    %10 = arith.addi %8, %9 : vector<168x1xi32>
    %c500_i32 = arith.constant 500 : i32
    %11 = vector.broadcast %c500_i32 : i32 to vector<168x1xi32>
    %12 = arith.cmpi slt, %10, %11 : vector<168x1xi32>
    %c0_i32_4 = arith.constant 0 : i32
    %13 = arith.sitofp %c0_i32_4 : i32 to f32
    %14 = vector.shape_cast %12 : vector<168x1xi1> to vector<168x1xi1>
    %15 = vector.broadcast %14 : vector<168x1xi1> to vector<168x32xi1>
    %16 = vector.broadcast %13 : f32 to vector<168x32xf32>
    %17 = arith.select %15, %3, %16 : vector<168x32xi1>, vector<168x32xf32>
    %c0_i32_5 = arith.constant 0 : i32
    %18 = arith.sitofp %c0_i32_5 : i32 to f32
    %19 = vector.shape_cast %12 : vector<168x1xi1> to vector<168x1xi1>
    %20 = vector.broadcast %19 : vector<168x1xi1> to vector<168x16xi1>
    %21 = vector.broadcast %18 : f32 to vector<168x16xf32>
    %22 = arith.select %20, %4, %21 : vector<168x16xi1>, vector<168x16xf32>
    %c0_6 = arith.constant 0 : index
    %c0_7 = arith.constant 0 : index
    %c0_8 = arith.constant 0 : index
    %23 = vector.load %arg4[%c0_6, %c0_7, %c0_8] : memref<1x32x32xf32, #tpu.memory_space<vmem>>, vector<1x32x32xf32>
    %24 = vector.shape_cast %23 : vector<1x32x32xf32> to vector<32x32xf32>
    %cst = arith.constant dense<0.000000e+00> : vector<32x32xf32>
    %25 = tpu.matmul %17, %17, %cst {dimension_numbers = #tpu.dot_dimension_numbers<[0], [0], [1], [1], [0, 1, 1, 1], [], []>} : vector<168x32xf32>, vector<168x32xf32>, vector<32x32xf32> -> vector<32x32xf32>
    %26 = arith.addf %24, %25 : vector<32x32xf32>
    %c0_9 = arith.constant 0 : index
    %c0_10 = arith.constant 0 : index
    %c0_11 = arith.constant 0 : index
    %27 = vector.load %arg4[%c0_9, %c0_10, %c0_11] : memref<1x32x32xf32, #tpu.memory_space<vmem>>, vector<1x32x32xf32>
    %28 = vector.shape_cast %27 : vector<1x32x32xf32> to vector<32x32xf32>
    %29 = vector.shape_cast %26 : vector<32x32xf32> to vector<1x32x32xf32>
    tpu.vector_store %arg4[%c0_9, %c0_10, %c0_11], %29 {strides = array<i32>} : memref<1x32x32xf32, #tpu.memory_space<vmem>>, vector<1x32x32xf32>,
    %c0_12 = arith.constant 0 : index
    %c0_13 = arith.constant 0 : index
    %c0_14 = arith.constant 0 : index
    %30 = vector.load %arg5[%c0_12, %c0_13, %c0_14] : memref<1x32x16xf32, #tpu.memory_space<vmem>>, vector<1x32x16xf32>
    %31 = vector.shape_cast %30 : vector<1x32x16xf32> to vector<32x16xf32>
    %cst_15 = arith.constant dense<0.000000e+00> : vector<32x16xf32>
    %32 = tpu.matmul %17, %22, %cst_15 {dimension_numbers = #tpu.dot_dimension_numbers<[0], [0], [1], [1], [0, 1, 1, 1], [], []>} : vector<168x32xf32>, vector<168x16xf32>, vector<32x16xf32> -> vector<32x16xf32>
    %33 = arith.addf %31, %32 : vector<32x16xf32>
    %c0_16 = arith.constant 0 : index
    %c0_17 = arith.constant 0 : index
    %c0_18 = arith.constant 0 : index
    %34 = vector.load %arg5[%c0_16, %c0_17, %c0_18] : memref<1x32x16xf32, #tpu.memory_space<vmem>>, vector<1x32x16xf32>
    %35 = vector.shape_cast %34 : vector<1x32x16xf32> to vector<32x16xf32>
    %36 = vector.shape_cast %33 : vector<32x16xf32> to vector<1x32x16xf32>
    tpu.vector_store %arg5[%c0_16, %c0_17, %c0_18], %36 {strides = array<i32>} : memref<1x32x16xf32, #tpu.memory_space<vmem>>, vector<1x32x16xf32>,
    %c0_19 = arith.constant 0 : index
    %c0_20 = arith.constant 0 : index
    %c0_21 = arith.constant 0 : index
    %37 = vector.load %arg6[%c0_19, %c0_20, %c0_21] : memref<1x16x16xf32, #tpu.memory_space<vmem>>, vector<1x16x16xf32>
    %38 = vector.shape_cast %37 : vector<1x16x16xf32> to vector<16x16xf32>
    %cst_22 = arith.constant dense<0.000000e+00> : vector<16x16xf32>
    %39 = tpu.matmul %22, %22, %cst_22 {dimension_numbers = #tpu.dot_dimension_numbers<[0], [0], [1], [1], [0, 1, 1, 1], [], []>} : vector<168x16xf32>, vector<168x16xf32>, vector<16x16xf32> -> vector<16x16xf32>
    %40 = arith.addf %38, %39 : vector<16x16xf32>
    %c0_23 = arith.constant 0 : index
    %c0_24 = arith.constant 0 : index
    %c0_25 = arith.constant 0 : index
    %41 = vector.load %arg6[%c0_23, %c0_24, %c0_25] : memref<1x16x16xf32, #tpu.memory_space<vmem>>, vector<1x16x16xf32>
    %42 = vector.shape_cast %41 : vector<1x16x16xf32> to vector<16x16xf32>
    %43 = vector.shape_cast %40 : vector<16x16xf32> to vector<1x16x16xf32>
    tpu.vector_store %arg6[%c0_23, %c0_24, %c0_25], %43 {strides = array<i32>} : memref<1x16x16xf32, #tpu.memory_space<vmem>>, vector<1x16x16xf32>,
    %c0_26 = arith.constant 0 : index
    %c0_27 = arith.constant 0 : index
    %c0_28 = arith.constant 0 : index
    %44 = vector.load %arg7[%c0_26, %c0_27, %c0_28] : memref<1x1x32xf32, #tpu.memory_space<vmem>>, vector<1x1x32xf32>
    %45 = vector.shape_cast %44 : vector<1x1x32xf32> to vector<1x32xf32>
    %cst_29 = arith.constant dense<0.000000e+00> : vector<32xf32>
    %46 = vector.multi_reduction <add>, %17, %cst_29 [0] : vector<168x32xf32> to vector<32xf32>
    %47 = vector.shape_cast %46 : vector<32xf32> to vector<1x32xf32>
    %48 = arith.addf %45, %47 : vector<1x32xf32>
    %c0_30 = arith.constant 0 : index
    %c0_31 = arith.constant 0 : index
    %c0_32 = arith.constant 0 : index
    %49 = vector.load %arg7[%c0_30, %c0_31, %c0_32] : memref<1x1x32xf32, #tpu.memory_space<vmem>>, vector<1x1x32xf32>
    %50 = vector.shape_cast %49 : vector<1x1x32xf32> to vector<1x32xf32>
    %51 = vector.shape_cast %48 : vector<1x32xf32> to vector<1x1x32xf32>
    tpu.vector_store %arg7[%c0_30, %c0_31, %c0_32], %51 {strides = array<i32>} : memref<1x1x32xf32, #tpu.memory_space<vmem>>, vector<1x1x32xf32>,
    return
  }
  func.func @transform_0(%arg0: i32, %arg1: i32) -> (i32, i32) {
    %c2_i32 = arith.constant 2 : i32
    %0 = arith.muli %arg0, %c2_i32 : i32
    %1 = arith.addi %0, %arg1 : i32
    %c2_i32_0 = arith.constant 2 : i32
    %2 = arith.minsi %1, %c2_i32_0 : i32
    %c0_i32 = arith.constant 0 : i32
    %c0_i32_1 = arith.constant 0 : i32
    return %2, %c0_i32 : i32, i32
  }
  func.func @transform_1(%arg0: i32, %arg1: i32) -> (i32, i32) {
    %c2_i32 = arith.constant 2 : i32
    %0 = arith.muli %arg0, %c2_i32 : i32
    %1 = arith.addi %0, %arg1 : i32
    %c2_i32_0 = arith.constant 2 : i32
    %2 = arith.minsi %1, %c2_i32_0 : i32
    %c0_i32 = arith.constant 0 : i32
    %c0_i32_1 = arith.constant 0 : i32
    return %2, %c0_i32 : i32, i32
  }
  func.func @transform_2(%arg0: i32, %arg1: i32) -> (i32, i32, i32) {
    %c0_i32 = arith.constant 0 : i32
    %c0_i32_0 = arith.constant 0 : i32
    %c0_i32_1 = arith.constant 0 : i32
    return %arg0, %c0_i32, %c0_i32_0 : i32, i32, i32
  }
  func.func @transform_3(%arg0: i32, %arg1: i32) -> (i32, i32, i32) {
    %c0_i32 = arith.constant 0 : i32
    %c0_i32_0 = arith.constant 0 : i32
    %c0_i32_1 = arith.constant 0 : i32
    return %arg0, %c0_i32, %c0_i32_0 : i32, i32, i32
  }
  func.func @transform_4(%arg0: i32, %arg1: i32) -> (i32, i32, i32) {
    %c0_i32 = arith.constant 0 : i32
    %c0_i32_0 = arith.constant 0 : i32
    %c0_i32_1 = arith.constant 0 : i32
    return %arg0, %c0_i32, %c0_i32_0 : i32, i32, i32
  }
  func.func @transform_5(%arg0: i32, %arg1: i32) -> (i32, i32, i32) {
    %c0_i32 = arith.constant 0 : i32
    %c0_i32_0 = arith.constant 0 : i32
    %c0_i32_1 = arith.constant 0 : i32
    return %arg0, %c0_i32, %c0_i32_0 : i32, i32, i32
  }
}

</mosaic_0001>

<llo_original>
// kernel: tpu_custom_call.1
$region0: #{tpu_custom_call.1}
  #allocation0 [shape = 'u32[]', space=smem, size = 0x4, offset = 0x4, fixed_abs, tag = 'smem constant byte address 0x4 - core index']
  #allocation1 [shape = 'u32[144,128]{1,0:T(1,128)}', space=vmem, size = 0x12000, scoped, tag = 'internal scratch']
  %s0 = inlined_call_operand.vmem [shape: f32[500,32], index: 0, kind: input, shape index: {}]
  %s1 = inlined_call_operand.vmem [shape: f32[500,16], index: 1, kind: input, shape index: {}]
  %s2 = inlined_call_operand.hbm [shape: f32[2,32,32], index: 2, kind: output, shape index: {0}]
  %s3 = inlined_call_operand.vmem [shape: f32[2,32,16], index: 3, kind: output, shape index: {1}]
  %s4 = inlined_call_operand.hbm [shape: f32[2,16,16], index: 4, kind: output, shape index: {2}]
  %s5 = inlined_call_operand.hbm [shape: f32[2,1,32], index: 5, kind: output, shape index: {3}]
  %6 = xla_tuple %s2, %s3, %s4, %s5
  %s7 = sld [smem:[#allocation0]]
  $region69: #{tpu_custom_call.1} parent=0
    _
  %s9 = ssub.s32 1, %s7
  %s10 = scalar_select 0, %s9, %s7
  $region1: #{tpu_custom_call.1} parent=0
    #allocation2 [shape = 'u8[32768]{0}', space=vmem, size = 0x8000, scoped, tag = 'output window, operand 0']
    #allocation3 [shape = 's32[2]{0}', space=sflag, size = 0x8, scoped, tag = 'scoped memory for tpu_custom_call.1']
    #allocation4 [shape = 'u8[16384]{0}', space=vmem, size = 0x4000, scoped, tag = 'output window, operand 2']
    #allocation5 [shape = 's32[2]{0}', space=sflag, size = 0x8, scoped, tag = 'scoped memory for tpu_custom_call.1']
    #allocation6 [shape = 'u8[1024]{0}', space=vmem, size = 0x400, scoped, tag = 'output window, operand 3']
    %11 = vsyncpa [#allocation3], 0
    %s12 = scalar_lea.sflag [#allocation3], 1
    %13 = vsyncpa %s12, 0
    %14 = vsyncpa [#allocation5], 0
    %s15 = scalar_lea.sflag [#allocation5], 1
    %16 = vsyncpa %s15, 0
    loop: start=0, step=1, limit=6
    $region2: #{tpu_custom_call.1} parent=1 // loop_pre_header
      _
    $region3: #{tpu_custom_call.1} parent=1 // loop_header
      %s18 = sphi 0, %s22
      %p19 = scmp.ge.s32.totalorder %s18, 6
      %s25 = sphi 0, %s37
      %s26 = sphi 0, %s33
      %s27 = sphi 0, %s25
      %s28 = sphi 0, %s26
      %s29 = sphi 0, %s27
      %s30 = sphi 0, %s28
      %s48 = sphi 0, %s50
      %s51 = sphi 0, %s48
      %s52 = sphi 0, %s51
      %s68 = sphi 0, %s52
      %s82 = sphi 0, %s84
      %s85 = sphi 0, %s82
      %s86 = sphi 0, %s85
      %s102 = sphi 0, %s86
      %s108 = sphi 0, %s110
      %s111 = sphi 0, %s108
      %s112 = sphi 0, %s111
      %s128 = sphi 0, %s112
      %s134 = sphi 0, %s136
      %s137 = sphi 0, %s134
      %s138 = sphi 0, %s137
      %s154 = sphi 0, %s138
      %s160 = sphi 0, %s162
      %s163 = sphi 0, %s160
      %s164 = sphi 0, %s163
      %s180 = sphi 0, %s164
      %s186 = sphi 0, %s188
      %s189 = sphi 0, %s186
      %s190 = sphi 0, %s189
      %s206 = sphi 0, %s190
    $region4: #{tpu_custom_call.1} parent=1 // loop_header_branch
      %21 = sbr.rel (%p19) target = $region8
    $region5: #{tpu_custom_call.1} parent=1 // loop_body
      %s23 = ssub.s32 %s18, 1
      %s24 = ssub.s32 %s18, 2
      %s31 = sadd.s32 1, %s26
      %p32 = scmp.ge.s32.totalorder %s31, 2
      %s33 = scalar_select %p32, 0, %s31
      %s34 = sadd.s32 1, %s25
      %s35 = scalar_select %p32, %s34, %s25
      %p36 = scmp.ge.s32.totalorder %s35, 2
      %s37 = scalar_select %p36, 0, %s35
      %s38 = smul.u32 %s25, 2
      %s39 = sadd.s32 %s38, %s26
      %p40 = scmp.lt.s32.totalorder %s39, 2
      %s41 = scalar_select %p40, %s39, 2
      %s42 = smul.u32 %s37, 2
      %s43 = sadd.s32 %s42, %s33
      %p44 = scmp.lt.s32.totalorder %s43, 2
      %s45 = scalar_select %p44, %s43, 2
      %s46 = ssub.s32 %s41, %s45
      %p47 = scmp.eq.s32.totalorder %s46, 0
      %s49 = sadd.s32 %s48, 1
      %s50 = scalar_select %p47, %s48, %s49
      %p53 = pneg %p47
      %p54 = scmp.eq.s32.totalorder %s18, 3
      %p55 = por %p53, %p54
      %p56 = scmp.ne.s32.totalorder %s48, %s51
      %p57 = scmp.eq.s32.totalorder %s18, 0
      %p58 = por %p56, %p57
      %p59 = scmp.ne.s32.totalorder %s48, %s51
      %p60 = scmp.eq.s32.totalorder %s23, 3
      %p61 = por %p59, %p60
      %p62 = scmp.ne.s32.totalorder %s51, %s52
      %p63 = scmp.eq.s32.totalorder %s23, 0
      %p64 = por %p62, %p63
      %p65 = scmp.ne.s32.totalorder %s51, %s52
      %p66 = scmp.eq.s32.totalorder %s24, 3
      %p67 = por %p65, %p66
      %p69 = scmp.ne.s32.totalorder %s52, %s68
      %p70 = scmp.eq.s32.totalorder %s24, 0
      %p71 = por %p69, %p70
      %s72 = smul.u32 %s25, 2
      %s73 = sadd.s32 %s72, %s26
      %p74 = scmp.lt.s32.totalorder %s73, 2
      %s75 = scalar_select %p74, %s73, 2
      %s76 = smul.u32 %s37, 2
      %s77 = sadd.s32 %s76, %s33
      %p78 = scmp.lt.s32.totalorder %s77, 2
      %s79 = scalar_select %p78, %s77, 2
      %s80 = ssub.s32 %s75, %s79
      %p81 = scmp.eq.s32.totalorder %s80, 0
      %s83 = sadd.s32 %s82, 1
      %s84 = scalar_select %p81, %s82, %s83
      %p87 = pneg %p81
      %p88 = scmp.eq.s32.totalorder %s18, 3
      %p89 = por %p87, %p88
      %p90 = scmp.ne.s32.totalorder %s82, %s85
      %p91 = scmp.eq.s32.totalorder %s18, 0
      %p92 = por %p90, %p91
      %p93 = scmp.ne.s32.totalorder %s82, %s85
      %p94 = scmp.eq.s32.totalorder %s23, 3
      %p95 = por %p93, %p94
      %p96 = scmp.ne.s32.totalorder %s85, %s86
      %p97 = scmp.eq.s32.totalorder %s23, 0
      %p98 = por %p96, %p97
      %p99 = scmp.ne.s32.totalorder %s85, %s86
      %p100 = scmp.eq.s32.totalorder %s24, 3
      %p101 = por %p99, %p100
      %p103 = scmp.ne.s32.totalorder %s86, %s102
      %p104 = scmp.eq.s32.totalorder %s24, 0
      %p105 = por %p103, %p104
      %s106 = ssub.s32 %s25, %s37
      %p107 = scmp.eq.s32.totalorder %s106, 0
      %s109 = sadd.s32 %s108, 1
      %s110 = scalar_select %p107, %s108, %s109
      %p113 = pneg %p107
      %p114 = scmp.eq.s32.totalorder %s18, 3
      %p115 = por %p113, %p114
      %p116 = scmp.ne.s32.totalorder %s108, %s111
      %p117 = scmp.eq.s32.totalorder %s18, 0
      %p118 = por %p116, %p117
      %p119 = scmp.ne.s32.totalorder %s108, %s111
      %p120 = scmp.eq.s32.totalorder %s23, 3
      %p121 = por %p119, %p120
      %p122 = scmp.ne.s32.totalorder %s111, %s112
      %p123 = scmp.eq.s32.totalorder %s23, 0
      %p124 = por %p122, %p123
      %p125 = scmp.ne.s32.totalorder %s111, %s112
      %p126 = scmp.eq.s32.totalorder %s24, 3
      %p127 = por %p125, %p126
      %p129 = scmp.ne.s32.totalorder %s112, %s128
      %p130 = scmp.eq.s32.totalorder %s24, 0
      %p131 = por %p129, %p130
      %s132 = ssub.s32 %s25, %s37
      %p133 = scmp.eq.s32.totalorder %s132, 0
      %s135 = sadd.s32 %s134, 1
      %s136 = scalar_select %p133, %s134, %s135
      %p139 = pneg %p133
      %p140 = scmp.eq.s32.totalorder %s18, 3
      %p141 = por %p139, %p140
      %p142 = scmp.ne.s32.totalorder %s134, %s137
      %p143 = scmp.eq.s32.totalorder %s18, 0
      %p144 = por %p142, %p143
      %p145 = scmp.ne.s32.totalorder %s134, %s137
      %p146 = scmp.eq.s32.totalorder %s23, 3
      %p147 = por %p145, %p146
      %p148 = scmp.ne.s32.totalorder %s137, %s138
      %p149 = scmp.eq.s32.totalorder %s23, 0
      %p150 = por %p148, %p149
      %p151 = scmp.ne.s32.totalorder %s137, %s138
      %p152 = scmp.eq.s32.totalorder %s24, 3
      %p153 = por %p151, %p152
      %p155 = scmp.ne.s32.totalorder %s138, %s154
      %p156 = scmp.eq.s32.totalorder %s24, 0
      %p157 = por %p155, %p156
      %s158 = ssub.s32 %s25, %s37
      %p159 = scmp.eq.s32.totalorder %s158, 0
      %s161 = sadd.s32 %s160, 1
      %s162 = scalar_select %p159, %s160, %s161
      %p165 = pneg %p159
      %p166 = scmp.eq.s32.totalorder %s18, 3
      %p167 = por %p165, %p166
      %p168 = scmp.ne.s32.totalorder %s160, %s163
      %p169 = scmp.eq.s32.totalorder %s18, 0
      %p170 = por %p168, %p169
      %p171 = scmp.ne.s32.totalorder %s160, %s163
      %p172 = scmp.eq.s32.totalorder %s23, 3
      %p173 = por %p171, %p172
      %p174 = scmp.ne.s32.totalorder %s163, %s164
      %p175 = scmp.eq.s32.totalorder %s23, 0
      %p176 = por %p174, %p175
      %p177 = scmp.ne.s32.totalorder %s163, %s164
      %p178 = scmp.eq.s32.totalorder %s24, 3
      %p179 = por %p177, %p178
      %p181 = scmp.ne.s32.totalorder %s164, %s180
      %p182 = scmp.eq.s32.totalorder %s24, 0
      %p183 = por %p181, %p182
      %s184 = ssub.s32 %s25, %s37
      %p185 = scmp.eq.s32.totalorder %s184, 0
      %s187 = sadd.s32 %s186, 1
      %s188 = scalar_select %p185, %s186, %s187
      %p191 = pneg %p185
      %p192 = scmp.eq.s32.totalorder %s18, 3
      %p193 = por %p191, %p192
      %p194 = scmp.ne.s32.totalorder %s186, %s189
      %p195 = scmp.eq.s32.totalorder %s18, 0
      %p196 = por %p194, %p195
      %p197 = scmp.ne.s32.totalorder %s186, %s189
      %p198 = scmp.eq.s32.totalorder %s23, 3
      %p199 = por %p197, %p198
      %p200 = scmp.ne.s32.totalorder %s189, %s190
      %p201 = scmp.eq.s32.totalorder %s23, 0
      %p202 = por %p200, %p201
      %p203 = scmp.ne.s32.totalorder %s189, %s190
      %p204 = scmp.eq.s32.totalorder %s24, 3
      %p205 = por %p203, %p204
      %p207 = scmp.ne.s32.totalorder %s190, %s206
      %p208 = scmp.eq.s32.totalorder %s24, 0
      %p209 = por %p207, %p208
      %p210 = scmp.le.s32.totalorder 1, %s18
      %p211 = scmp.lt.s32.totalorder %s18, 5
      %p212 = pnand %p210, %p211
      %p213 = pneg %p212
      // Predicated region
      $region9: #{tpu_custom_call.1} parent=5 // pred_check
        _
      $region10: #{tpu_custom_call.1} parent=5 // pred_check_branch
        %215 = sbr.rel (%p212) target = $region12
      $region11: #{tpu_custom_call.1} parent=5 // pred_region
        %s216 = ssub.s32 %s18, 1
      $region12: #{tpu_custom_call.1} parent=5 // pred_fallthru
        _
      %p217 = scmp.lt.s32.totalorder %s18, 4
      // Predicated region
      $region13: #{tpu_custom_call.1} parent=5 // pred_check
        %p218 = pneg %p217
      $region14: #{tpu_custom_call.1} parent=5 // pred_check_branch
        %220 = sbr.rel (%p218) target = $region16
      $region15: #{tpu_custom_call.1} parent=5 // pred_region
        // Predicated region
        $region17: #{tpu_custom_call.1} parent=15 // pred_check
          %p221 = pneg %p58
        $region18: #{tpu_custom_call.1} parent=15 // pred_check_branch
          %223 = sbr.rel (%p221) target = $region20
        $region19: #{tpu_custom_call.1} parent=15 // pred_region
          %s224 = smul.u32 %s25, 2
          %s225 = sadd.s32 %s224, %s26
          %p226 = scmp.lt.s32.totalorder %s225, 2
          %s227 = scalar_select %p226, %s225, 2
          %s228 = smul.u32 21, %s227
          %p229 = scmp.lt.s32.totalorder %s228, 62
          %s230 = scalar_select %p229, %s228, 62
          %s231 = smul.addr %s230, 8
          %s232 = scalar_lea.vmem %s0, %s231
          %s233 = smul.u32 %s25, 2
          %s234 = sadd.s32 %s233, %s26
          %p235 = scmp.lt.s32.totalorder %s234, 2
          %s236 = scalar_select %p235, %s234, 2
          %s237 = smul.u32 21, %s236
        $region20: #{tpu_custom_call.1} parent=15 // pred_fallthru
          _
        // Predicated region
        $region21: #{tpu_custom_call.1} parent=15 // pred_check
          %p238 = pneg %p92
        $region22: #{tpu_custom_call.1} parent=15 // pred_check_branch
          %240 = sbr.rel (%p238) target = $region24
        $region23: #{tpu_custom_call.1} parent=15 // pred_region
          %s241 = smul.u32 %s25, 2
          %s242 = sadd.s32 %s241, %s26
          %p243 = scmp.lt.s32.totalorder %s242, 2
          %s244 = scalar_select %p243, %s242, 2
          %s245 = smul.u32 21, %s244
          %p246 = scmp.lt.s32.totalorder %s245, 62
          %s247 = scalar_select %p246, %s245, 62
          %s248 = smul.addr %s247, 8
          %s249 = scalar_lea.vmem %s1, %s248
          %s250 = smul.u32 %s25, 2
          %s251 = sadd.s32 %s250, %s26
          %p252 = scmp.lt.s32.totalorder %s251, 2
          %s253 = scalar_select %p252, %s251, 2
          %s254 = smul.u32 21, %s253
        $region24: #{tpu_custom_call.1} parent=15 // pred_fallthru
          _
      $region16: #{tpu_custom_call.1} parent=5 // pred_fallthru
        _
      %p255 = scmp.le.s32.totalorder 1, %s18
      %p256 = scmp.lt.s32.totalorder %s18, 5
      %p257 = pnand %p255, %p256
      %p258 = pneg %p257
      // Predicated region
      $region25: #{tpu_custom_call.1} parent=5 // pred_check
        _
      $region26: #{tpu_custom_call.1} parent=5 // pred_check_branch
        %260 = sbr.rel (%p257) target = $region28
      $region27: #{tpu_custom_call.1} parent=5 // pred_region
        %s261 = ssub.s32 %s18, 1
        %s262 = smul.u32 %s27, 2
        %s263 = sadd.s32 %s262, %s28
        %p264 = scmp.lt.s32.totalorder %s263, 2
        %s265 = scalar_select %p264, %s263, 2
        %s266 = smul.u32 21, %s265
        %p267 = scmp.lt.s32.totalorder %s266, 62
        %s268 = scalar_select %p267, %s266, 62
        %s269 = smul.addr %s268, 8
        %s270 = scalar_lea.vmem %s0, %s269
        %p271 = pneg %p64
        %p272 = pneg %p61
        %s273 = smul.u32 %s27, 2
        %s274 = sadd.s32 %s273, %s28
        %p275 = scmp.lt.s32.totalorder %s274, 2
        %s276 = scalar_select %p275, %s274, 2
        %s277 = smul.u32 21, %s276
        %p278 = scmp.lt.s32.totalorder %s277, 62
        %s279 = scalar_select %p278, %s277, 62
        %s280 = smul.addr %s279, 8
        %s281 = scalar_lea.vmem %s1, %s280
        %p282 = pneg %p98
        %p283 = pneg %p95
        %p284 = pneg %p124
        %p285 = pneg %p121
        %s286 = sand.u32 %s111, 1
        %s287 = scalar_lea.sflag [#allocation3], %s286
        %s288 = sand.u32 %s111, 1
        %s289 = smul.addr %s288, 32
        %s290 = scalar_lea.vmem [#allocation2], %s289
        %p291 = pneg %p150
        %p292 = pneg %p147
        %p293 = scmp.lt.s32.totalorder %s27, 1
        %s294 = scalar_select %p293, %s27, 1
        %s295 = smul.addr %s294, 4
        %s296 = smul.addr %s295, 8
        %s297 = scalar_lea.vmem %s3, %s296
        %p298 = pneg %p176
        %p299 = pneg %p173
        %s300 = sand.u32 %s23, 1
        %s301 = scalar_lea.sflag [#allocation5], %s300
        %s302 = sand.u32 %s163, 1
        %s303 = smul.addr %s302, 16
        %s304 = scalar_lea.vmem [#allocation4], %s303
        %p305 = pneg %p202
        %p306 = pneg %p199
        %s307 = sand.u32 %s23, 1
        %s308 = scalar_lea.sflag [#allocation5], %s307
        %s309 = sand.u32 %s189, 1
        %s310 = scalar_lea.vmem [#allocation6], %s309
        %s311 = smul.u32 %s27, 2
        %s312 = sadd.s32 %s311, %s28
        %p313 = scmp.lt.s32.totalorder %s312, 2
        %s314 = scalar_select %p313, %s312, 2
        %s315 = smul.u32 21, %s314
        %p316 = scmp.lt.s32.totalorder %s315, 62
        %s317 = scalar_select %p316, %s315, 62
        %s318 = smul.addr %s317, 8
        %s319 = scalar_lea.vmem %s0, %s318
        %s320 = smul.u32 %s27, 2
        %s321 = sadd.s32 %s320, %s28
        %p322 = scmp.lt.s32.totalorder %s321, 2
        %s323 = scalar_select %p322, %s321, 2
        %s324 = smul.u32 21, %s323
        %s325 = smul.u32 %s27, 2
        %s326 = sadd.s32 %s325, %s28
        %p327 = scmp.lt.s32.totalorder %s326, 2
        %s328 = scalar_select %p327, %s326, 2
        %s329 = smul.u32 21, %s328
        %p330 = scmp.lt.s32.totalorder %s329, 62
        %s331 = scalar_select %p330, %s329, 62
        %s332 = smul.addr %s331, 8
        %s333 = scalar_lea.vmem %s1, %s332
        %s334 = smul.u32 %s27, 2
        %s335 = sadd.s32 %s334, %s28
        %p336 = scmp.lt.s32.totalorder %s335, 2
        %s337 = scalar_select %p336, %s335, 2
        %s338 = smul.u32 21, %s337
        %p339 = scmp.lt.s32.totalorder %s27, 1
        %s340 = scalar_select %p339, %s27, 1
        %s341 = smul.addr %s340, 4
        %s342 = smul.addr %s341, 8
        %s343 = scalar_lea.vmem %s3, %s342
        %p344 = scmp.eq.s32.totalorder %s28, 0
        // Predicated region
        $region29: #{tpu_custom_call.1} parent=27 // pred_check
          %p345 = pneg %p344
        $region30: #{tpu_custom_call.1} parent=27 // pred_check_branch
          %347 = sbr.rel (%p345) target = $region32
        $region31: #{tpu_custom_call.1} parent=27 // pred_region
          %vm348 = vcmask 261120
          %349 = vst.msk [vmem:[%s290] sm:$0xff] %vm348, 0.0
          %350 = vst.msk [vmem:[%s290 + $0x8] sm:$0xff] %vm348, 0.0
          %351 = vst.msk [vmem:[%s290 + $0x10] sm:$0xff] %vm348, 0.0
          %352 = vst.msk [vmem:[%s290 + $0x18] sm:$0xff] %vm348, 0.0
          %vm353 = vcmask 130048
          %354 = vst.msk [vmem:[%s343] sm:$0xff] %vm353, 0.0
          %355 = vst.msk [vmem:[%s343 + $0x8] sm:$0xff] %vm353, 0.0
          %356 = vst.msk [vmem:[%s343 + $0x10] sm:$0xff] %vm353, 0.0
          %357 = vst.msk [vmem:[%s343 + $0x18] sm:$0xff] %vm353, 0.0
          %358 = vst.msk [vmem:[%s304] sm:$0xff] %vm353, 0.0
          %359 = vst.msk [vmem:[%s304 + $0x8] sm:$0xff] %vm353, 0.0
          %vm360 = vcmask 253952
          %361 = vst.msk [vmem:[%s310] sm:$0x1] %vm360, 0.0
        $region32: #{tpu_custom_call.1} parent=27 // pred_fallthru
          _
        %v362 = vld [vmem:[%s319] sm:$0xff]
        %v363 = vld [vmem:[%s319 + $0x8] sm:$0xff]
        %v364 = vld [vmem:[%s319 + $0x10] sm:$0xff]
        %v365 = vld [vmem:[%s319 + $0x18] sm:$0xff]
        %v366 = vld [vmem:[%s319 + $0x20] sm:$0xff]
        %v367 = vld [vmem:[%s319 + $0x28] sm:$0xff]
        %v368 = vld [vmem:[%s319 + $0x30] sm:$0xff]
        %v369 = vld [vmem:[%s319 + $0x38] sm:$0xff]
        %v370 = vld [vmem:[%s319 + $0x40] sm:$0xff]
        %v371 = vld [vmem:[%s319 + $0x48] sm:$0xff]
        %v372 = vld [vmem:[%s319 + $0x50] sm:$0xff]
        %v373 = vld [vmem:[%s319 + $0x58] sm:$0xff]
        %v374 = vld [vmem:[%s319 + $0x60] sm:$0xff]
        %v375 = vld [vmem:[%s319 + $0x68] sm:$0xff]
        %v376 = vld [vmem:[%s319 + $0x70] sm:$0xff]
        %v377 = vld [vmem:[%s319 + $0x78] sm:$0xff]
        %v378 = vld [vmem:[%s319 + $0x80] sm:$0xff]
        %v379 = vld [vmem:[%s319 + $0x88] sm:$0xff]
        %v380 = vld [vmem:[%s319 + $0x90] sm:$0xff]
        %v381 = vld [vmem:[%s319 + $0x98] sm:$0xff]
        %v382 = vld [vmem:[%s319 + $0xa0] sm:$0xff]
        %v383 = vld [vmem:[%s333] sm:$0xff]
        %v384 = vld [vmem:[%s333 + $0x8] sm:$0xff]
        %v385 = vld [vmem:[%s333 + $0x10] sm:$0xff]
        %v386 = vld [vmem:[%s333 + $0x18] sm:$0xff]
        %v387 = vld [vmem:[%s333 + $0x20] sm:$0xff]
        %v388 = vld [vmem:[%s333 + $0x28] sm:$0xff]
        %v389 = vld [vmem:[%s333 + $0x30] sm:$0xff]
        %v390 = vld [vmem:[%s333 + $0x38] sm:$0xff]
        %v391 = vld [vmem:[%s333 + $0x40] sm:$0xff]
        %v392 = vld [vmem:[%s333 + $0x48] sm:$0xff]
        %v393 = vld [vmem:[%s333 + $0x50] sm:$0xff]
        %v394 = vld [vmem:[%s333 + $0x58] sm:$0xff]
        %v395 = vld [vmem:[%s333 + $0x60] sm:$0xff]
        %v396 = vld [vmem:[%s333 + $0x68] sm:$0xff]
        %v397 = vld [vmem:[%s333 + $0x70] sm:$0xff]
        %v398 = vld [vmem:[%s333 + $0x78] sm:$0xff]
        %v399 = vld [vmem:[%s333 + $0x80] sm:$0xff]
        %v400 = vld [vmem:[%s333 + $0x88] sm:$0xff]
        %v401 = vld [vmem:[%s333 + $0x90] sm:$0xff]
        %v402 = vld [vmem:[%s333 + $0x98] sm:$0xff]
        %v403 = vld [vmem:[%s333 + $0xa0] sm:$0xff]
        %s404 = smul.u32 %s27, 2
        %s405 = sadd.s32 %s404, %s28
        %s406 = smul.u32 %s405, 168
        %v407 = vlaneseq
        %v408 = vshrl.u32 %v407, 7
        %v409 = vadd.s32 %v408, 8
        %v410 = vadd.s32 %v408, 16
        %v411 = vadd.s32 %v408, 24
        %v412 = vadd.s32 %v408, 32
        %v413 = vadd.s32 %v408, 40
        %v414 = vadd.s32 %v408, 48
        %v415 = vadd.s32 %v408, 56
        %v416 = vadd.s32 %v408, 64
        %v417 = vadd.s32 %v408, 72
        %v418 = vadd.s32 %v408, 80
        %v419 = vadd.s32 %v408, 88
        %v420 = vadd.s32 %v408, 96
        %v421 = vadd.s32 %v408, 104
        %v422 = vadd.s32 %v408, 112
        %v423 = vadd.s32 %v408, 120
        %v424 = vadd.s32 %v408, 128
        %v425 = vadd.s32 %v408, 136
        %v426 = vadd.s32 %v408, 144
        %v427 = vadd.s32 %v408, 152
        %v428 = vadd.s32 %v408, 160
        %v429 = vstv %s406
        %v430 = vadd.s32 %v408, %v429
        %v431 = vadd.s32 %v409, %v429
        %v432 = vadd.s32 %v410, %v429
        %v433 = vadd.s32 %v411, %v429
        %v434 = vadd.s32 %v412, %v429
        %v435 = vadd.s32 %v413, %v429
        %v436 = vadd.s32 %v414, %v429
        %v437 = vadd.s32 %v415, %v429
        %v438 = vadd.s32 %v416, %v429
        %v439 = vadd.s32 %v417, %v429
        %v440 = vadd.s32 %v418, %v429
        %v441 = vadd.s32 %v419, %v429
        %v442 = vadd.s32 %v420, %v429
        %v443 = vadd.s32 %v421, %v429
        %v444 = vadd.s32 %v422, %v429
        %v445 = vadd.s32 %v423, %v429
        %v446 = vadd.s32 %v424, %v429
        %v447 = vadd.s32 %v425, %v429
        %v448 = vadd.s32 %v426, %v429
        %v449 = vadd.s32 %v427, %v429
        %v450 = vadd.s32 %v428, %v429
        %vm451 = vcmp.lt.s32.totalorder %v430, 500
        %vm452 = vcmp.lt.s32.totalorder %v431, 500
        %vm453 = vcmp.lt.s32.totalorder %v432, 500
        %vm454 = vcmp.lt.s32.totalorder %v433, 500
        %vm455 = vcmp.lt.s32.totalorder %v434, 500
        %vm456 = vcmp.lt.s32.totalorder %v435, 500
        %vm457 = vcmp.lt.s32.totalorder %v436, 500
        %vm458 = vcmp.lt.s32.totalorder %v437, 500
        %vm459 = vcmp.lt.s32.totalorder %v438, 500
        %vm460 = vcmp.lt.s32.totalorder %v439, 500
        %vm461 = vcmp.lt.s32.totalorder %v440, 500
        %vm462 = vcmp.lt.s32.totalorder %v441, 500
        %vm463 = vcmp.lt.s32.totalorder %v442, 500
        %vm464 = vcmp.lt.s32.totalorder %v443, 500
        %vm465 = vcmp.lt.s32.totalorder %v444, 500
        %vm466 = vcmp.lt.s32.totalorder %v445, 500
        %vm467 = vcmp.lt.s32.totalorder %v446, 500
        %vm468 = vcmp.lt.s32.totalorder %v447, 500
        %vm469 = vcmp.lt.s32.totalorder %v448, 500
        %vm470 = vcmp.lt.s32.totalorder %v449, 500
        %vm471 = vcmp.lt.s32.totalorder %v450, 500
        %v472 = vsel %vm451, 1, 0
        %v473 = vsel %vm452, 1, 0
        %v474 = vsel %vm453, 1, 0
        %v475 = vsel %vm454, 1, 0
        %v476 = vsel %vm455, 1, 0
        %v477 = vsel %vm456, 1, 0
        %v478 = vsel %vm457, 1, 0
        %v479 = vsel %vm458, 1, 0
        %v480 = vsel %vm459, 1, 0
        %v481 = vsel %vm460, 1, 0
        %v482 = vsel %vm461, 1, 0
        %v483 = vsel %vm462, 1, 0
        %v484 = vsel %vm463, 1, 0
        %v485 = vsel %vm464, 1, 0
        %v486 = vsel %vm465, 1, 0
        %v487 = vsel %vm466, 1, 0
        %v488 = vsel %vm467, 1, 0
        %v489 = vsel %vm468, 1, 0
        %v490 = vsel %vm469, 1, 0
        %v491 = vsel %vm470, 1, 0
        %v492 = vsel %vm471, 1, 0
        %vm493 = vcmp.eq.s32.totalorder %v472, 1
        %vm494 = vcmp.eq.s32.totalorder %v473, 1
        %vm495 = vcmp.eq.s32.totalorder %v474, 1
        %vm496 = vcmp.eq.s32.totalorder %v475, 1
        %vm497 = vcmp.eq.s32.totalorder %v476, 1
        %vm498 = vcmp.eq.s32.totalorder %v477, 1
        %vm499 = vcmp.eq.s32.totalorder %v478, 1
        %vm500 = vcmp.eq.s32.totalorder %v479, 1
        %vm501 = vcmp.eq.s32.totalorder %v480, 1
        %vm502 = vcmp.eq.s32.totalorder %v481, 1
        %vm503 = vcmp.eq.s32.totalorder %v482, 1
        %vm504 = vcmp.eq.s32.totalorder %v483, 1
        %vm505 = vcmp.eq.s32.totalorder %v484, 1
        %vm506 = vcmp.eq.s32.totalorder %v485, 1
        %vm507 = vcmp.eq.s32.totalorder %v486, 1
        %vm508 = vcmp.eq.s32.totalorder %v487, 1
        %vm509 = vcmp.eq.s32.totalorder %v488, 1
        %vm510 = vcmp.eq.s32.totalorder %v489, 1
        %vm511 = vcmp.eq.s32.totalorder %v490, 1
        %vm512 = vcmp.eq.s32.totalorder %v491, 1
        %vm513 = vcmp.eq.s32.totalorder %v492, 1
        %v514 = vsel %vm493, %v362, 0.0
        %v515 = vsel %vm494, %v363, 0.0
        %v516 = vsel %vm495, %v364, 0.0
        %v517 = vsel %vm496, %v365, 0.0
        %v518 = vsel %vm497, %v366, 0.0
        %v519 = vsel %vm498, %v367, 0.0
        %v520 = vsel %vm499, %v368, 0.0
        %v521 = vsel %vm500, %v369, 0.0
        %v522 = vsel %vm501, %v370, 0.0
        %v523 = vsel %vm502, %v371, 0.0
        %v524 = vsel %vm503, %v372, 0.0
        %v525 = vsel %vm504, %v373, 0.0
        %v526 = vsel %vm505, %v374, 0.0
        %v527 = vsel %vm506, %v375, 0.0
        %v528 = vsel %vm507, %v376, 0.0
        %v529 = vsel %vm508, %v377, 0.0
        %v530 = vsel %vm509, %v378, 0.0
        %v531 = vsel %vm510, %v379, 0.0
        %v532 = vsel %vm511, %v380, 0.0
        %v533 = vsel %vm512, %v381, 0.0
        %v534 = vsel %vm513, %v382, 0.0
        %v535 = vsel %vm493, %v383, 0.0
        %v536 = vsel %vm494, %v384, 0.0
        %v537 = vsel %vm495, %v385, 0.0
        %v538 = vsel %vm496, %v386, 0.0
        %v539 = vsel %vm497, %v387, 0.0
        %v540 = vsel %vm498, %v388, 0.0
        %v541 = vsel %vm499, %v389, 0.0
        %v542 = vsel %vm500, %v390, 0.0
        %v543 = vsel %vm501, %v391, 0.0
        %v544 = vsel %vm502, %v392, 0.0
        %v545 = vsel %vm503, %v393, 0.0
        %v546 = vsel %vm504, %v394, 0.0
        %v547 = vsel %vm505, %v395, 0.0
        %v548 = vsel %vm506, %v396, 0.0
        %v549 = vsel %vm507, %v397, 0.0
        %v550 = vsel %vm508, %v398, 0.0
        %v551 = vsel %vm509, %v399, 0.0
        %v552 = vsel %vm510, %v400, 0.0
        %v553 = vsel %vm511, %v401, 0.0
        %v554 = vsel %vm512, %v402, 0.0
        %v555 = vsel %vm513, %v403, 0.0
        %v556 = vld [vmem:[%s290] sm:$0xff]
        %v557 = vld [vmem:[%s290 + $0x8] sm:$0xff]
        %v558 = vld [vmem:[%s290 + $0x10] sm:$0xff]
        %v559 = vld [vmem:[%s290 + $0x18] sm:$0xff]
        %560 = vxpose.xlu0.b32.start [1/16] %v514, 128
        %561 = vxpose.xlu0.b32.cont [2/16] %v515, 128
        %562 = vxpose.xlu0.b32.cont [3/16] %v516, 128
        %563 = vxpose.xlu0.b32.cont [4/16] %v517, 128
        %564 = vxpose.xlu0.b32.cont [5/16] %v518, 128
        %565 = vxpose.xlu0.b32.cont [6/16] %v519, 128
        %566 = vxpose.xlu0.b32.cont [7/16] %v520, 128
        %567 = vxpose.xlu0.b32.cont [8/16] %v521, 128
        %568 = vxpose.xlu0.b32.cont [9/16] %v522, 128
        %569 = vxpose.xlu0.b32.cont [10/16] %v523, 128
        %570 = vxpose.xlu0.b32.cont [11/16] %v524, 128
        %571 = vxpose.xlu0.b32.cont [12/16] %v525, 128
        %572 = vxpose.xlu0.b32.cont [13/16] %v526, 128
        %573 = vxpose.xlu0.b32.cont [14/16] %v527, 128
        %574 = vxpose.xlu0.b32.cont [15/16] %v528, 128
        %575 = vxpose.xlu0.b32.end [16/16] %v529, 128
        %v576 = vpop.trf.xlu0
        %v577 = vpop.trf.xlu0
        %v578 = vpop.trf.xlu0
        %v579 = vpop.trf.xlu0
        %v580 = vpop.trf.xlu0
        %v581 = vpop.trf.xlu0
        %v582 = vpop.trf.xlu0
        %v583 = vpop.trf.xlu0
        %v584 = vpop.trf.xlu0
        %v585 = vpop.trf.xlu0
        %v586 = vpop.trf.xlu0
        %v587 = vpop.trf.xlu0
        %v588 = vpop.trf.xlu0
        %v589 = vpop.trf.xlu0
        %v590 = vpop.trf.xlu0
        %v591 = vpop.trf.xlu0
        %592 = vxpose.xlu0.b32.start [1/16] %v530, 128
        %593 = vxpose.xlu0.b32.cont [2/16] %v531, 128
        %594 = vxpose.xlu0.b32.cont [3/16] %v532, 128
        %595 = vxpose.xlu0.b32.cont [4/16] %v533, 128
        %596 = vxpose.xlu0.b32.cont [5/16] %v534, 128
        %597 = vxpose.xlu0.b32.cont [6/16] 0.0, 128
        %598 = vxpose.xlu0.b32.cont [7/16] 0.0, 128
        %599 = vxpose.xlu0.b32.cont [8/16] 0.0, 128
        %600 = vxpose.xlu0.b32.cont [9/16] 0.0, 128
        %601 = vxpose.xlu0.b32.cont [10/16] 0.0, 128
        %602 = vxpose.xlu0.b32.cont [11/16] 0.0, 128
        %603 = vxpose.xlu0.b32.cont [12/16] 0.0, 128
        %604 = vxpose.xlu0.b32.cont [13/16] 0.0, 128
        %605 = vxpose.xlu0.b32.cont [14/16] 0.0, 128
        %606 = vxpose.xlu0.b32.cont [15/16] 0.0, 128
        %607 = vxpose.xlu0.b32.end [16/16] 0.0, 128
        %v608 = vpop.trf.xlu0
        %v609 = vpop.trf.xlu0
        %v610 = vpop.trf.xlu0
        %v611 = vpop.trf.xlu0
        %v612 = vpop.trf.xlu0
        %v613 = vpop.trf.xlu0
        %v614 = vpop.trf.xlu0
        %v615 = vpop.trf.xlu0
        %v616 = vpop.trf.xlu0
        %v617 = vpop.trf.xlu0
        %v618 = vpop.trf.xlu0
        %v619 = vpop.trf.xlu0
        %v620 = vpop.trf.xlu0
        %v621 = vpop.trf.xlu0
        %v622 = vpop.trf.xlu0
        %v623 = vpop.trf.xlu0
        %vm624 = vcmask 326656
        %v626 = vsel %vm624, %v608, 0
        %v629 = vsel %vm624, %v609, 0
        %v632 = vsel %vm624, %v610, 0
        %v635 = vsel %vm624, %v611, 0
        %637 = vmatprep.subr.mxu0 0.0
        %638 = vmatpush1.msra.mxu0 %v514
        %639 = vmatprep.subr.mxu0 0.0
        %640 = vmatpush1.msra.mxu0 %v515
        %641 = vmatprep.subr.mxu0 0.0
        %642 = vmatpush1.msra.mxu0 %v516
        %643 = vmatprep.subr.mxu0 0.0
        %644 = vmatpush1.msra.mxu0 %v517
        %645 = vmatprep.subr.mxu0 0.0
        %646 = vmatpush1.msra.mxu0 %v518
        %647 = vmatprep.subr.mxu0 0.0
        %648 = vmatpush1.msra.mxu0 %v519
        %649 = vmatprep.subr.mxu0 0.0
        %650 = vmatpush1.msra.mxu0 %v520
        %651 = vmatprep.subr.mxu0 0.0
        %652 = vmatpush1.msra.mxu0 %v521
        %653 = vmatprep.subr.mxu0 0.0
        %654 = vmatpush1.msra.mxu0 %v522
        %655 = vmatprep.subr.mxu0 0.0
        %656 = vmatpush1.msra.mxu0 %v523
        %657 = vmatprep.subr.mxu0 0.0
        %658 = vmatpush1.msra.mxu0 %v524
        %659 = vmatprep.subr.mxu0 0.0
        %660 = vmatpush1.msra.mxu0 %v525
        %661 = vmatprep.subr.mxu0 0.0
        %662 = vmatpush1.msra.mxu0 %v526
        %663 = vmatprep.subr.mxu0 0.0
        %664 = vmatpush1.msra.mxu0 %v527
        %665 = vmatprep.subr.mxu0 0.0
        %666 = vmatpush1.msra.mxu0 %v528
        %667 = vmatprep.subr.mxu0 0.0
        %668 = vmatpush1.msra.mxu0 %v529
        %669 = vmatprep.subr.mxu0 0.0
        %670 = vmatpush1.msra.mxu0 %v530
        %671 = vmatprep.subr.mxu0 0.0
        %672 = vmatpush1.msra.mxu0 %v531
        %673 = vmatprep.subr.mxu0 0.0
        %674 = vmatpush1.msra.mxu0 %v532
        %675 = vmatprep.subr.mxu0 0.0
        %676 = vmatpush1.msra.mxu0 %v533
        %677 = vmatprep.subr.mxu0 0.0
        %678 = vmatpush1.msra.mxu0 %v534
        %679 = vmatprep.subr.mxu0 0.0
        %680 = vmatpush1.msra.mxu0 0.0
        %681 = vmatprep.subr.mxu0 0.0
        %682 = vmatpush1.msra.mxu0 0.0
        %683 = vmatprep.subr.mxu0 0.0
        %684 = vmatpush1.msra.mxu0 0.0
        %685 = vmatprep.subr.mxu0 0.0
        %686 = vmatpush1.msra.mxu0 0.0
        %687 = vmatprep.subr.mxu0 0.0
        %688 = vmatpush1.msra.mxu0 0.0
        %689 = vmatprep.subr.mxu0 0.0
        %690 = vmatpush1.msra.mxu0 0.0
        %691 = vmatprep.subr.mxu0 0.0
        %692 = vmatpush1.msra.mxu0 0.0
        %693 = vmatprep.subr.mxu0 0.0
        %694 = vmatpush1.msra.mxu0 0.0
        %695 = vmatprep.subr.mxu0 0.0
        %696 = vmatpush1.msra.mxu0 0.0
        %697 = vmatprep.subr.mxu0 0.0
        %698 = vmatpush1.msra.mxu0 0.0
        %699 = vmatprep.subr.mxu0 0.0
        %700 = vmatpush1.msra.mxu0 0.0
        %701 = vmatprep.mubr.f32.mxu0 %v626
        %702 = vmatmul.mubr.f32.gmra.mrb[0].mxu0 %v576
        %v703 = vpop.f32.mrb[0].mxu0
        %v704 = vadd.f32 0.0, %v703
        %v705 = vpop.f32.mrb[0].mxu0
        %706 = vmatprep.mubr.f32.mxu0 %v629
        %707 = vmatmul.mubr.f32.gmra.mrb[0].mxu0 %v577
        %v708 = vpop.f32.mrb[0].mxu0
        %v709 = vadd.f32 0.0, %v708
        %v710 = vpop.f32.mrb[0].mxu0
        %711 = vmatprep.mubr.f32.mxu0 %v632
        %712 = vmatmul.mubr.f32.gmra.mrb[0].mxu0 %v578
        %v713 = vpop.f32.mrb[0].mxu0
        %v714 = vadd.f32 0.0, %v713
        %v715 = vpop.f32.mrb[0].mxu0
        %716 = vmatprep.mubr.f32.mxu0 %v635
        %717 = vmatmul.mubr.f32.gmra.mrb[0].mxu0 %v579
        %v718 = vpop.f32.mrb[0].mxu0
        %v719 = vadd.f32 0.0, %v718
        %v720 = vpop.f32.mrb[0].mxu0
        %721 = vdwg.mxu0
        %v722 = vadd.f32 %v556, %v704
        %v723 = vadd.f32 %v557, %v709
        %v724 = vadd.f32 %v558, %v714
        %v725 = vadd.f32 %v559, %v719
        %vm726 = vcmask 261120
        %727 = vst.msk [vmem:[%s290] sm:$0xff] %vm726, %v722
        %728 = vst.msk [vmem:[%s290 + $0x8] sm:$0xff] %vm726, %v723
        %729 = vst.msk [vmem:[%s290 + $0x10] sm:$0xff] %vm726, %v724
        %730 = vst.msk [vmem:[%s290 + $0x18] sm:$0xff] %vm726, %v725
        %v731 = vld [vmem:[%s343] sm:$0xff]
        %v732 = vld [vmem:[%s343 + $0x8] sm:$0xff]
        %v733 = vld [vmem:[%s343 + $0x10] sm:$0xff]
        %v734 = vld [vmem:[%s343 + $0x18] sm:$0xff]
        %735 = vmatprep.subr.mxu0 0.0
        %736 = vmatpush1.msra.mxu0 %v535
        %737 = vmatprep.subr.mxu0 0.0
        %738 = vmatpush1.msra.mxu0 %v536
        %739 = vmatprep.subr.mxu0 0.0
        %740 = vmatpush1.msra.mxu0 %v537
        %741 = vmatprep.subr.mxu0 0.0
        %742 = vmatpush1.msra.mxu0 %v538
        %743 = vmatprep.subr.mxu0 0.0
        %744 = vmatpush1.msra.mxu0 %v539
        %745 = vmatprep.subr.mxu0 0.0
        %746 = vmatpush1.msra.mxu0 %v540
        %747 = vmatprep.subr.mxu0 0.0
        %748 = vmatpush1.msra.mxu0 %v541
        %749 = vmatprep.subr.mxu0 0.0
        %750 = vmatpush1.msra.mxu0 %v542
        %751 = vmatprep.subr.mxu0 0.0
        %752 = vmatpush1.msra.mxu0 %v543
        %753 = vmatprep.subr.mxu0 0.0
        %754 = vmatpush1.msra.mxu0 %v544
        %755 = vmatprep.subr.mxu0 0.0
        %756 = vmatpush1.msra.mxu0 %v545
        %757 = vmatprep.subr.mxu0 0.0
        %758 = vmatpush1.msra.mxu0 %v546
        %759 = vmatprep.subr.mxu0 0.0
        %760 = vmatpush1.msra.mxu0 %v547
        %761 = vmatprep.subr.mxu0 0.0
        %762 = vmatpush1.msra.mxu0 %v548
        %763 = vmatprep.subr.mxu0 0.0
        %764 = vmatpush1.msra.mxu0 %v549
        %765 = vmatprep.subr.mxu0 0.0
        %766 = vmatpush1.msra.mxu0 %v550
        %767 = vmatprep.subr.mxu0 0.0
        %768 = vmatpush1.msra.mxu0 %v551
        %769 = vmatprep.subr.mxu0 0.0
        %770 = vmatpush1.msra.mxu0 %v552
        %771 = vmatprep.subr.mxu0 0.0
        %772 = vmatpush1.msra.mxu0 %v553
        %773 = vmatprep.subr.mxu0 0.0
        %774 = vmatpush1.msra.mxu0 %v554
        %775 = vmatprep.subr.mxu0 0.0
        %776 = vmatpush1.msra.mxu0 %v555
        %777 = vmatprep.subr.mxu0 0.0
        %778 = vmatpush1.msra.mxu0 0.0
        %779 = vmatprep.subr.mxu0 0.0
        %780 = vmatpush1.msra.mxu0 0.0
        %781 = vmatprep.subr.mxu0 0.0
        %782 = vmatpush1.msra.mxu0 0.0
        %783 = vmatprep.subr.mxu0 0.0
        %784 = vmatpush1.msra.mxu0 0.0
        %785 = vmatprep.subr.mxu0 0.0
        %786 = vmatpush1.msra.mxu0 0.0
        %787 = vmatprep.subr.mxu0 0.0
        %788 = vmatpush1.msra.mxu0 0.0
        %789 = vmatprep.subr.mxu0 0.0
        %790 = vmatpush1.msra.mxu0 0.0
        %791 = vmatprep.subr.mxu0 0.0
        %792 = vmatpush1.msra.mxu0 0.0
        %793 = vmatprep.subr.mxu0 0.0
        %794 = vmatpush1.msra.mxu0 0.0
        %795 = vmatprep.subr.mxu0 0.0
        %796 = vmatpush1.msra.mxu0 0.0
        %797 = vmatprep.subr.mxu0 0.0
        %798 = vmatpush1.msra.mxu0 0.0
        %799 = vmatprep.mubr.f32.mxu0 %v626
        %800 = vmatmul.mubr.f32.gmra.mrb[0].mxu0 %v576
        %v801 = vpop.f32.mrb[0].mxu0
        %v802 = vadd.f32 0.0, %v801
        %v803 = vpop.f32.mrb[0].mxu0
        %804 = vmatprep.mubr.f32.mxu0 %v629
        %805 = vmatmul.mubr.f32.gmra.mrb[0].mxu0 %v577
        %v806 = vpop.f32.mrb[0].mxu0
        %v807 = vadd.f32 0.0, %v806
        %v808 = vpop.f32.mrb[0].mxu0
        %809 = vmatprep.mubr.f32.mxu0 %v632
        %810 = vmatmul.mubr.f32.gmra.mrb[0].mxu0 %v578
        %v811 = vpop.f32.mrb[0].mxu0
        %v812 = vadd.f32 0.0, %v811
        %v813 = vpop.f32.mrb[0].mxu0
        %814 = vmatprep.mubr.f32.mxu0 %v635
        %815 = vmatmul.mubr.f32.gmra.mrb[0].mxu0 %v579
        %v816 = vpop.f32.mrb[0].mxu0
        %v817 = vadd.f32 0.0, %v816
        %v818 = vpop.f32.mrb[0].mxu0
        %819 = vdwg.mxu0
        %v820 = vadd.f32 %v731, %v802
        %v821 = vadd.f32 %v732, %v807
        %v822 = vadd.f32 %v733, %v812
        %v823 = vadd.f32 %v734, %v817
        %vm824 = vcmask 130048
        %825 = vst.msk [vmem:[%s343] sm:$0xff] %vm824, %v820
        %826 = vst.msk [vmem:[%s343 + $0x8] sm:$0xff] %vm824, %v821
        %827 = vst.msk [vmem:[%s343 + $0x10] sm:$0xff] %vm824, %v822
        %828 = vst.msk [vmem:[%s343 + $0x18] sm:$0xff] %vm824, %v823
        %v829 = vld [vmem:[%s304] sm:$0xff]
        %v830 = vld [vmem:[%s304 + $0x8] sm:$0xff]
        %831 = vxpose.xlu0.b32.start [1/16] %v535, 128
        %832 = vxpose.xlu0.b32.cont [2/16] %v536, 128
        %833 = vxpose.xlu0.b32.cont [3/16] %v537, 128
        %834 = vxpose.xlu0.b32.cont [4/16] %v538, 128
        %835 = vxpose.xlu0.b32.cont [5/16] %v539, 128
        %836 = vxpose.xlu0.b32.cont [6/16] %v540, 128
        %837 = vxpose.xlu0.b32.cont [7/16] %v541, 128
        %838 = vxpose.xlu0.b32.cont [8/16] %v542, 128
        %839 = vxpose.xlu0.b32.cont [9/16] %v543, 128
        %840 = vxpose.xlu0.b32.cont [10/16] %v544, 128
        %841 = vxpose.xlu0.b32.cont [11/16] %v545, 128
        %842 = vxpose.xlu0.b32.cont [12/16] %v546, 128
        %843 = vxpose.xlu0.b32.cont [13/16] %v547, 128
        %844 = vxpose.xlu0.b32.cont [14/16] %v548, 128
        %845 = vxpose.xlu0.b32.cont [15/16] %v549, 128
        %846 = vxpose.xlu0.b32.end [16/16] %v550, 128
        %v847 = vpop.trf.xlu0
        %v848 = vpop.trf.xlu0
        %v849 = vpop.trf.xlu0
        %v850 = vpop.trf.xlu0
        %v851 = vpop.trf.xlu0
        %v852 = vpop.trf.xlu0
        %v853 = vpop.trf.xlu0
        %v854 = vpop.trf.xlu0
        %v855 = vpop.trf.xlu0
        %v856 = vpop.trf.xlu0
        %v857 = vpop.trf.xlu0
        %v858 = vpop.trf.xlu0
        %v859 = vpop.trf.xlu0
        %v860 = vpop.trf.xlu0
        %v861 = vpop.trf.xlu0
        %v862 = vpop.trf.xlu0
        %863 = vxpose.xlu0.b32.start [1/16] %v551, 128
        %864 = vxpose.xlu0.b32.cont [2/16] %v552, 128
        %865 = vxpose.xlu0.b32.cont [3/16] %v553, 128
        %866 = vxpose.xlu0.b32.cont [4/16] %v554, 128
        %867 = vxpose.xlu0.b32.cont [5/16] %v555, 128
        %868 = vxpose.xlu0.b32.cont [6/16] 0.0, 128
        %869 = vxpose.xlu0.b32.cont [7/16] 0.0, 128
        %870 = vxpose.xlu0.b32.cont [8/16] 0.0, 128
        %871 = vxpose.xlu0.b32.cont [9/16] 0.0, 128
        %872 = vxpose.xlu0.b32.cont [10/16] 0.0, 128
        %873 = vxpose.xlu0.b32.cont [11/16] 0.0, 128
        %874 = vxpose.xlu0.b32.cont [12/16] 0.0, 128
        %875 = vxpose.xlu0.b32.cont [13/16] 0.0, 128
        %876 = vxpose.xlu0.b32.cont [14/16] 0.0, 128
        %877 = vxpose.xlu0.b32.cont [15/16] 0.0, 128
        %878 = vxpose.xlu0.b32.end [16/16] 0.0, 128
        %v879 = vpop.trf.xlu0
        %v880 = vpop.trf.xlu0
        %v881 = vpop.trf.xlu0
        %v882 = vpop.trf.xlu0
        %v883 = vpop.trf.xlu0
        %v884 = vpop.trf.xlu0
        %v885 = vpop.trf.xlu0
        %v886 = vpop.trf.xlu0
        %v887 = vpop.trf.xlu0
        %v888 = vpop.trf.xlu0
        %v889 = vpop.trf.xlu0
        %v890 = vpop.trf.xlu0
        %v891 = vpop.trf.xlu0
        %v892 = vpop.trf.xlu0
        %v893 = vpop.trf.xlu0
        %v894 = vpop.trf.xlu0
        %v896 = vsel %vm624, %v879, 0
        %v899 = vsel %vm624, %v880, 0
        %901 = vmatprep.subr.mxu0 0.0
        %902 = vmatpush1.msra.mxu0 %v535
        %903 = vmatprep.subr.mxu0 0.0
        %904 = vmatpush1.msra.mxu0 %v536
        %905 = vmatprep.subr.mxu0 0.0
        %906 = vmatpush1.msra.mxu0 %v537
        %907 = vmatprep.subr.mxu0 0.0
        %908 = vmatpush1.msra.mxu0 %v538
        %909 = vmatprep.subr.mxu0 0.0
        %910 = vmatpush1.msra.mxu0 %v539
        %911 = vmatprep.subr.mxu0 0.0
        %912 = vmatpush1.msra.mxu0 %v540
        %913 = vmatprep.subr.mxu0 0.0
        %914 = vmatpush1.msra.mxu0 %v541
        %915 = vmatprep.subr.mxu0 0.0
        %916 = vmatpush1.msra.mxu0 %v542
        %917 = vmatprep.subr.mxu0 0.0
        %918 = vmatpush1.msra.mxu0 %v543
        %919 = vmatprep.subr.mxu0 0.0
        %920 = vmatpush1.msra.mxu0 %v544
        %921 = vmatprep.subr.mxu0 0.0
        %922 = vmatpush1.msra.mxu0 %v545
        %923 = vmatprep.subr.mxu0 0.0
        %924 = vmatpush1.msra.mxu0 %v546
        %925 = vmatprep.subr.mxu0 0.0
        %926 = vmatpush1.msra.mxu0 %v547
        %927 = vmatprep.subr.mxu0 0.0
        %928 = vmatpush1.msra.mxu0 %v548
        %929 = vmatprep.subr.mxu0 0.0
        %930 = vmatpush1.msra.mxu0 %v549
        %931 = vmatprep.subr.mxu0 0.0
        %932 = vmatpush1.msra.mxu0 %v550
        %933 = vmatprep.subr.mxu0 0.0
        %934 = vmatpush1.msra.mxu0 %v551
        %935 = vmatprep.subr.mxu0 0.0
        %936 = vmatpush1.msra.mxu0 %v552
        %937 = vmatprep.subr.mxu0 0.0
        %938 = vmatpush1.msra.mxu0 %v553
        %939 = vmatprep.subr.mxu0 0.0
        %940 = vmatpush1.msra.mxu0 %v554
        %941 = vmatprep.subr.mxu0 0.0
        %942 = vmatpush1.msra.mxu0 %v555
        %943 = vmatprep.subr.mxu0 0.0
        %944 = vmatpush1.msra.mxu0 0.0
        %945 = vmatprep.subr.mxu0 0.0
        %946 = vmatpush1.msra.mxu0 0.0
        %947 = vmatprep.subr.mxu0 0.0
        %948 = vmatpush1.msra.mxu0 0.0
        %949 = vmatprep.subr.mxu0 0.0
        %950 = vmatpush1.msra.mxu0 0.0
        %951 = vmatprep.subr.mxu0 0.0
        %952 = vmatpush1.msra.mxu0 0.0
        %953 = vmatprep.subr.mxu0 0.0
        %954 = vmatpush1.msra.mxu0 0.0
        %955 = vmatprep.subr.mxu0 0.0
        %956 = vmatpush1.msra.mxu0 0.0
        %957 = vmatprep.subr.mxu0 0.0
        %958 = vmatpush1.msra.mxu0 0.0
        %959 = vmatprep.subr.mxu0 0.0
        %960 = vmatpush1.msra.mxu0 0.0
        %961 = vmatprep.subr.mxu0 0.0
        %962 = vmatpush1.msra.mxu0 0.0
        %963 = vmatprep.subr.mxu0 0.0
        %964 = vmatpush1.msra.mxu0 0.0
        %965 = vmatprep.mubr.f32.mxu0 %v896
        %966 = vmatmul.mubr.f32.gmra.mrb[0].mxu0 %v847
        %v967 = vpop.f32.mrb[0].mxu0
        %v968 = vadd.f32 0.0, %v967
        %v969 = vpop.f32.mrb[0].mxu0
        %970 = vmatprep.mubr.f32.mxu0 %v899
        %971 = vmatmul.mubr.f32.gmra.mrb[0].mxu0 %v848
        %v972 = vpop.f32.mrb[0].mxu0
        %v973 = vadd.f32 0.0, %v972
        %v974 = vpop.f32.mrb[0].mxu0
        %975 = vdwg.mxu0
        %v976 = vadd.f32 %v829, %v968
        %v977 = vadd.f32 %v830, %v973
        %978 = vst.msk [vmem:[%s304] sm:$0xff] %vm824, %v976
        %979 = vst.msk [vmem:[%s304 + $0x8] sm:$0xff] %vm824, %v977
        %v980 = vld [vmem:[%s310] sm:$0x1]
        %v981 = vsel %vm726, %v514, 0.0
        %v982 = vsel %vm726, %v515, 0.0
        %v983 = vadd.f32 %v981, %v982
        %v984 = vsel %vm726, %v516, 0.0
        %v985 = vadd.f32 %v983, %v984
        %v986 = vsel %vm726, %v517, 0.0
        %v987 = vadd.f32 %v985, %v986
        %v988 = vsel %vm726, %v518, 0.0
        %v989 = vadd.f32 %v987, %v988
        %v990 = vsel %vm726, %v519, 0.0
        %v991 = vadd.f32 %v989, %v990
        %v992 = vsel %vm726, %v520, 0.0
        %v993 = vadd.f32 %v991, %v992
        %v994 = vsel %vm726, %v521, 0.0
        %v995 = vadd.f32 %v993, %v994
        %v996 = vsel %vm726, %v522, 0.0
        %v997 = vadd.f32 %v995, %v996
        %v998 = vsel %vm726, %v523, 0.0
        %v999 = vadd.f32 %v997, %v998
        %v1000 = vsel %vm726, %v524, 0.0
        %v1001 = vadd.f32 %v999, %v1000
        %v1002 = vsel %vm726, %v525, 0.0
        %v1003 = vadd.f32 %v1001, %v1002
        %v1004 = vsel %vm726, %v526, 0.0
        %v1005 = vadd.f32 %v1003, %v1004
        %v1006 = vsel %vm726, %v527, 0.0
        %v1007 = vadd.f32 %v1005, %v1006
        %v1008 = vsel %vm726, %v528, 0.0
        %v1009 = vadd.f32 %v1007, %v1008
        %v1010 = vsel %vm726, %v529, 0.0
        %v1011 = vadd.f32 %v1009, %v1010
        %v1012 = vsel %vm726, %v530, 0.0
        %v1013 = vadd.f32 %v1011, %v1012
        %v1014 = vsel %vm726, %v531, 0.0
        %v1015 = vadd.f32 %v1013, %v1014
        %v1016 = vsel %vm726, %v532, 0.0
        %v1017 = vadd.f32 %v1015, %v1016
        %v1018 = vsel %vm726, %v533, 0.0
        %v1019 = vadd.f32 %v1017, %v1018
        %v1020 = vsel %vm726, %v534, 0.0
        %v1021 = vadd.f32 %v1019, %v1020
        %v1022 = vrot.slane %v1021, 4
        %v1023 = vadd.f32 %v1021, %v1022
        %v1024 = vrot.slane %v1023, 2
        %v1025 = vadd.f32 %v1023, %v1024
        %v1026 = vrot.slane %v1025, 1
        %v1027 = vadd.f32 %v1025, %v1026
        %v1028 = vadd.f32 %v980, %v1027
        %vm1029 = vcmask 253952
        %1030 = vst.msk [vmem:[%s310] sm:$0x1] %vm1029, %v1028
        %s1031 = sand.u32 %s111, 1
        %s1032 = scalar_lea.sflag [#allocation3], %s1031
        %s1033 = sand.u32 %s111, 1
        %s1034 = smul.addr %s1033, 32
        %s1035 = scalar_lea.vmem [#allocation2], %s1034
        %p1036 = scmp.lt.s32.totalorder %s27, 1
        %s1037 = scalar_select %p1036, %s27, 1
        %s1038 = smul.addr %s1037, 4
        %s1039 = smul.addr %s1038, 8
        %s1040 = scalar_lea.vmem %s3, %s1039
        %s1041 = sand.u32 %s23, 1
        %s1042 = scalar_lea.sflag [#allocation5], %s1041
        %s1043 = sand.u32 %s163, 1
        %s1044 = smul.addr %s1043, 16
        %s1045 = scalar_lea.vmem [#allocation4], %s1044
        %s1046 = sand.u32 %s23, 1
        %s1047 = scalar_lea.sflag [#allocation5], %s1046
        %s1048 = sand.u32 %s189, 1
        %s1049 = scalar_lea.vmem [#allocation6], %s1048
        // Predicated region
        $region33: #{tpu_custom_call.1} parent=27 // pred_check
          %p1050 = pneg %p121
        $region34: #{tpu_custom_call.1} parent=27 // pred_check_branch
          %1052 = sbr.rel (%p1050) target = $region36
        $region35: #{tpu_custom_call.1} parent=27 // pred_region
          %s1054 = ssub.s32 512, 512
          %1055 = vsyncadd %s1032, %s1054
          %s1056 = smul.addr %s27, 4
          %s1057 = smul.addr %s1056, 128
          %s1058 = scalar_lea.hbm %s2, %s1057
          %s1059 = sshll.u32 %s1035, 4
          %s1060 = int_to_ptr.vmem [resolvable:$true] %s1059
          %1065 = dma.vmem_to_hbm [thread:$0]  %s1060, 512, %s1058, %s1032, 128, 128, 8
        $region36: #{tpu_custom_call.1} parent=27 // pred_fallthru
          _
        // Predicated region
        $region37: #{tpu_custom_call.1} parent=27 // pred_check
          %p1066 = pneg %p147
        $region38: #{tpu_custom_call.1} parent=27 // pred_check_branch
          %1068 = sbr.rel (%p1066) target = $region40
        $region39: #{tpu_custom_call.1} parent=27 // pred_region
          _
        $region40: #{tpu_custom_call.1} parent=27 // pred_fallthru
          _
        // Predicated region
        $region41: #{tpu_custom_call.1} parent=27 // pred_check
          %p1069 = pneg %p173
        $region42: #{tpu_custom_call.1} parent=27 // pred_check_branch
          %1071 = sbr.rel (%p1069) target = $region44
        $region43: #{tpu_custom_call.1} parent=27 // pred_region
          %s1073 = ssub.s32 256, 256
          %1074 = vsyncadd %s1042, %s1073
          %s1075 = smul.addr %s27, 2
          %s1076 = smul.addr %s1075, 128
          %s1077 = scalar_lea.hbm %s4, %s1076
          %s1078 = sshll.u32 %s1045, 4
          %s1079 = int_to_ptr.vmem [resolvable:$true] %s1078
          %1084 = dma.vmem_to_hbm [thread:$0]  %s1079, 256, %s1077, %s1042, 128, 128, 8
        $region44: #{tpu_custom_call.1} parent=27 // pred_fallthru
          _
        // Predicated region
        $region45: #{tpu_custom_call.1} parent=27 // pred_check
          %p1085 = pneg %p199
        $region46: #{tpu_custom_call.1} parent=27 // pred_check_branch
          %1087 = sbr.rel (%p1085) target = $region48
        $region47: #{tpu_custom_call.1} parent=27 // pred_region
          %s1089 = ssub.s32 16, 16
          %1090 = vsyncadd %s1047, %s1089
          %s1091 = smul.addr %s27, 16
          %s1092 = scalar_lea.hbm %s5, %s1091
          %s1094 = sshll.u32 %s1049, 4
          %s1095 = int_to_ptr.vmem [resolvable:$true] %s1094
          %1097 = dma.vmem_to_hbm [thread:$0]  %s1095, 16, %s1092, %s1047
        $region48: #{tpu_custom_call.1} parent=27 // pred_fallthru
          _
      $region28: #{tpu_custom_call.1} parent=5 // pred_fallthru
        _
      %p1098 = scmp.le.s32.totalorder 2, %s18
      // Predicated region
      $region49: #{tpu_custom_call.1} parent=5 // pred_check
        %p1099 = pneg %p1098
      $region50: #{tpu_custom_call.1} parent=5 // pred_check_branch
        %1101 = sbr.rel (%p1099) target = $region52
      $region51: #{tpu_custom_call.1} parent=5 // pred_region
        %s1102 = ssub.s32 %s18, 2
        // Predicated region
        $region53: #{tpu_custom_call.1} parent=51 // pred_check
          %p1103 = pneg %p127
        $region54: #{tpu_custom_call.1} parent=51 // pred_check_branch
          %1105 = sbr.rel (%p1103) target = $region56
        $region55: #{tpu_custom_call.1} parent=51 // pred_region
          %s1106 = sand.u32 %s112, 1
          %s1107 = scalar_lea.sflag [#allocation3], %s1106
          %s1108 = sand.u32 %s112, 1
          %s1109 = smul.addr %s1108, 32
          %s1110 = scalar_lea.vmem [#allocation2], %s1109
          %1111 = dma.done %s1107, 512
        $region56: #{tpu_custom_call.1} parent=51 // pred_fallthru
          _
        // Predicated region
        $region57: #{tpu_custom_call.1} parent=51 // pred_check
          %p1112 = pneg %p153
        $region58: #{tpu_custom_call.1} parent=51 // pred_check_branch
          %1114 = sbr.rel (%p1112) target = $region60
        $region59: #{tpu_custom_call.1} parent=51 // pred_region
          %p1115 = scmp.lt.s32.totalorder %s29, 1
          %s1116 = scalar_select %p1115, %s29, 1
          %s1117 = smul.addr %s1116, 4
          %s1118 = smul.addr %s1117, 8
          %s1119 = scalar_lea.vmem %s3, %s1118
        $region60: #{tpu_custom_call.1} parent=51 // pred_fallthru
          _
        // Predicated region
        $region61: #{tpu_custom_call.1} parent=51 // pred_check
          %p1120 = pneg %p179
        $region62: #{tpu_custom_call.1} parent=51 // pred_check_branch
          %1122 = sbr.rel (%p1120) target = $region64
        $region63: #{tpu_custom_call.1} parent=51 // pred_region
          %s1123 = sand.u32 %s24, 1
          %s1124 = scalar_lea.sflag [#allocation5], %s1123
          %s1125 = sand.u32 %s164, 1
          %s1126 = smul.addr %s1125, 16
          %s1127 = scalar_lea.vmem [#allocation4], %s1126
          %1128 = dma.done %s1124, 256
        $region64: #{tpu_custom_call.1} parent=51 // pred_fallthru
          _
        // Predicated region
        $region65: #{tpu_custom_call.1} parent=51 // pred_check
          %p1129 = pneg %p205
        $region66: #{tpu_custom_call.1} parent=51 // pred_check_branch
          %1131 = sbr.rel (%p1129) target = $region68
        $region67: #{tpu_custom_call.1} parent=51 // pred_region
          %s1132 = sand.u32 %s24, 1
          %s1133 = scalar_lea.sflag [#allocation5], %s1132
          %s1134 = sand.u32 %s190, 1
          %s1135 = scalar_lea.vmem [#allocation6], %s1134
          %1136 = dma.done %s1133, 16
        $region68: #{tpu_custom_call.1} parent=51 // pred_fallthru
          _
      $region52: #{tpu_custom_call.1} parent=5 // pred_fallthru
        _
    $region6: #{tpu_custom_call.1} parent=1 // loop_footer
      %s22 = sadd.s32 1, %s18
    $region7: #{tpu_custom_call.1} parent=1 // loop_footer_branch
      %17 = sbr.rel target = $region3
    $region8: #{tpu_custom_call.1} parent=1 // loop_exit
      _
    %1137 = vsyncpa [#allocation3], 1
    %s1138 = scalar_lea.sflag [#allocation3], 1
    %1139 = vsyncpa %s1138, 1
    %1140 = vsyncpa [#allocation5], 1
    %s1141 = scalar_lea.sflag [#allocation5], 1
    %1142 = vsyncpa %s1141, 1

</llo_original>
